<compile_context>
chip_gen: v7x
topology: tpu7x:2x2x1
jax: 0.10.0
libtpu: 0.0.40
codegen_flags: <defaults>
</compile_context>

<pallas_src>
import jax
import jax.numpy as jnp
from jax.experimental import pallas as pl
from jax.experimental.pallas import tpu as pltpu


def _mlp_kernel(
    x_ref,
    w1_ref, b1_ref,
    w2_ref, b2_ref,
    w3_ref, b3_ref,
    w4_ref, b4_ref,
    w5_ref, b5_ref,
    o_ref,
):
    compute_dtype = w1_ref.dtype
    x = x_ref[...]  # already cast to compute dtype in the wrapper

    def layer(h, w_ref, b_ref):
        # Linear (MXU, f32 accumulation) + bias, then ReLU *after* the downcast
        # (exact, and runs as packed bf16 VALU on v6e/v7x). BN already folded.
        y = jnp.dot(h, w_ref[...], preferred_element_type=jnp.float32) + b_ref[...]
        return jnp.maximum(y.astype(compute_dtype), 0)

    h = layer(x, w1_ref, b1_ref)   # (TB, 256)
    h = layer(h, w2_ref, b2_ref)   # (TB, 128)
    h = layer(h, w3_ref, b3_ref)   # (TB, 64)
    h = layer(h, w4_ref, b4_ref)   # (TB, 32)

    # Final Linear(32, 1): VPU multiply + lane reduce (avoid an N=1 MXU pass).
    w5_row = w5_ref[...]                                             # (1, 32) f32
    logits = jnp.sum(h.astype(jnp.float32) * w5_row, axis=-1, keepdims=True)
    logits = logits + b5_ref[...]                                    # (TB, 1)

    # Exact, numerically-stable sigmoid (clamp avoids exp overflow; division is
    # exact -> f32 path matches the pure-JAX reference to float precision).
    logits = jnp.clip(logits, -30.0, 30.0)
    o_ref[...] = 1.0 / (1.0 + jnp.exp(-logits))


def _round_up(n, m):
    return ((n + m - 1) // m) * m


def doraemon_forward(x, params, *, tile_b=1024, compute_dtype=jnp.bfloat16):
    """x: (B, input_dim) float32. params: dict of layer parameters (see init_params)."""
    B, F = x.shape
    eps = 1e-5

    # --- Fold each BatchNorm affine into the NEXT Linear (exact, wrapper-side). ---
    ws = [params["w1"]]
    bs = [params["b1"]]
    for li in (2, 3, 4, 5):
        s = params[f"bn{li-1}_gamma"] / jnp.sqrt(params[f"bn{li-1}_var"] + eps)
        sh = params[f"bn{li-1}_beta"] - params[f"bn{li-1}_mean"] * s
        w = params[f"w{li}"]                     # (in, out)
        b = params[f"b{li}"]                     # (out,)
        ws.append(s[:, None] * w)                # diag(s) @ W
        bs.append(sh @ w + b)                    # sh @ W + b

    # --- Lane-align the input feature dim (pad K rows of w1 with zeros: exact). ---
    Fp = _round_up(F, 128)
    w1_full = ws[0]
    if Fp != F:
        w1_full = jnp.pad(w1_full, ((0, Fp - F), (0, 0)))

    # Hidden-layer weights in compute dtype (bf16 by default: MXU-native, half the DMA).
    w1 = w1_full.astype(compute_dtype)
    w2, w3, w4 = (w.astype(compute_dtype) for w in ws[1:4])
    # Final (32, 1) weight passed lane-major as a (1, 32) f32 row for the VPU reduce.
    w5 = jnp.transpose(ws[4]).astype(jnp.float32)
    # Biases stay f32 (added onto the f32 accumulator).
    b1, b2, b3, b4, b5 = (b[None, :].astype(jnp.float32) for b in bs)

    # --- Batch tiling: big tiles for MXU fill; guarantee >=2 grid steps when ---
    # --- possible so both v7x TensorCores get work; pad odd batches.         ---
    tb = _round_up(min(int(tile_b), _round_up(B, 8)), 8)
    if _round_up(B, tb) // tb < 2 and B > 8:
        tb = _round_up((B + 1) // 2, 8)          # split into (at least) 2 tiles
    Bp = _round_up(B, tb)

    x = x.astype(compute_dtype)
    if Bp != B or Fp != F:
        x = jnp.pad(x, ((0, Bp - B), (0, Fp - F)))

    x_spec = pl.BlockSpec((tb, Fp), lambda i: (i, 0))
    const_spec = lambda p: pl.BlockSpec(p.shape, lambda i: (0, 0))  # resident params

    if tb >= 4096:
        compiler_params = pltpu.CompilerParams(
            dimension_semantics=("parallel",),
            vmem_limit_bytes=48 * 1024 * 1024,
        )
    else:
        compiler_params = pltpu.CompilerParams(
            dimension_semantics=("parallel",),
        )

    out = pl.pallas_call(
        _mlp_kernel,
        out_shape=jax.ShapeDtypeStruct((Bp, 1), jnp.float32),
        grid=(Bp // tb,),
        in_specs=[
            x_spec,
            const_spec(w1), const_spec(b1),
            const_spec(w2), const_spec(b2),
            const_spec(w3), const_spec(b3),
            const_spec(w4), const_spec(b4),
            const_spec(w5), const_spec(b5),
        ],
        out_specs=pl.BlockSpec((tb, 1), lambda i: (i, 0)),
        compiler_params=compiler_params,
    )(x, w1, b1, w2, b2, w3, b3, w4, b4, w5, b5)

    return out[:B]


def init_params(input_dim, key):
    """Deterministic PyTorch-style init: Linear U(-1/sqrt(fan_in), 1/sqrt(fan_in)),
    BatchNorm gamma=1, beta=0, running_mean=0, running_var=1."""
    dims = [input_dim, 256, 128, 64, 32, 1]
    params = {}
    keys = jax.random.split(key, 2 * (len(dims) - 1))
    for li in range(1, len(dims)):
        fan_in, fan_out = dims[li - 1], dims[li]
        bound = 1.0 / jnp.sqrt(fan_in)
        kw, kb = keys[2 * (li - 1)], keys[2 * (li - 1) + 1]
        # store weight as (in, out) == PyTorch weight.T
        params[f"w{li}"] = jax.random.uniform(
            kw, (fan_in, fan_out), jnp.float32, -bound, bound
        )
        params[f"b{li}"] = jax.random.uniform(
            kb, (fan_out,), jnp.float32, -bound, bound
        )
        if li <= 4:  # BatchNorm after first four Linear+ReLU blocks
            params[f"bn{li}_gamma"] = jnp.ones((fan_out,), jnp.float32)
            params[f"bn{li}_beta"] = jnp.zeros((fan_out,), jnp.float32)
            params[f"bn{li}_mean"] = jnp.zeros((fan_out,), jnp.float32)
            params[f"bn{li}_var"] = jnp.ones((fan_out,), jnp.float32)
    return params


def reference_forward(x, params):
    """Pure-JAX f32 reference of the eval-mode forward (unfolded BN)."""
    eps = 1e-5
    h = x
    for li in (1, 2, 3, 4):
        h = h @ params[f"w{li}"] + params[f"b{li}"]
        h = jnp.maximum(h, 0.0)
        scale = params[f"bn{li}_gamma"] / jnp.sqrt(params[f"bn{li}_var"] + eps)
        shift = params[f"bn{li}_beta"] - params[f"bn{li}_mean"] * scale
        h = h * scale + shift
    logits = h @ params["w5"] + params["b5"]
    return jax.nn.sigmoid(logits)


if __name__ == "__main__":
    input_dim = 32
    batch = 8

    key = jax.random.PRNGKey(0)
    k_params, k_x = jax.random.split(key)
    params = init_params(input_dim, k_params)
    x = jax.random.normal(k_x, (batch, input_dim), jnp.float32)

    ref = reference_forward(x, params)

    # f32 path: validates BN folding + exact sigmoid against the pure-JAX reference.
    out_f32 = jax.block_until_ready(
        doraemon_forward(x, params, compute_dtype=jnp.float32)
    )
    assert out_f32.shape == (batch, 1)
    assert jnp.allclose(out_f32, ref, atol=1e-3, rtol=1e-3), "f32 mismatch vs reference"

    # bf16 path (default): MXU-native on v6e/v7x; loosened tolerance for bf16 matmuls.
    out_bf16 = jax.block_until_ready(doraemon_forward(x, params))
    assert out_bf16.shape == (batch, 1)
    assert jnp.allclose(out_bf16, ref, atol=5e-2, rtol=5e-2), "bf16 mismatch vs reference"

    # Multi-tile / padded-batch path: exercises >=2 grid steps and batch padding.
    batch2 = 20
    x2 = jax.random.normal(jax.random.PRNGKey(1), (batch2, input_dim), jnp.float32)
    ref2 = reference_forward(x2, params)
    out2 = jax.block_until_ready(
        doraemon_forward(x2, params, compute_dtype=jnp.float32)
    )
    assert out2.shape == (batch2, 1)
    assert jnp.allclose(out2, ref2, atol=1e-3, rtol=1e-3), "multi-tile mismatch"

    print("KERNEL_OK")
</pallas_src>

<mosaic_0001>
module attributes {stable_mosaic.version = 11 : i64} {
  func.func @_mlp_kernel(%arg0: i32, %arg1: memref<8x128xf32, #tpu.memory_space<vmem>>, %arg2: memref<128x256xf32, #tpu.memory_space<vmem>>, %arg3: memref<1x256xf32, #tpu.memory_space<vmem>>, %arg4: memref<256x128xf32, #tpu.memory_space<vmem>>, %arg5: memref<1x128xf32, #tpu.memory_space<vmem>>, %arg6: memref<128x64xf32, #tpu.memory_space<vmem>>, %arg7: memref<1x64xf32, #tpu.memory_space<vmem>>, %arg8: memref<64x32xf32, #tpu.memory_space<vmem>>, %arg9: memref<1x32xf32, #tpu.memory_space<vmem>>, %arg10: memref<1x32xf32, #tpu.memory_space<vmem>>, %arg11: memref<1x1xf32, #tpu.memory_space<vmem>>, %arg12: memref<8x1xf32, #tpu.memory_space<vmem>>) attributes {dimension_semantics = [#tpu.dimension_semantics<parallel>], iteration_bounds = array<i64: 1>, scalar_prefetch = 0 : i64, scratch_operands = 0 : i64, tpu.core_type = #tpu.core_type<tc>, window_params = [{transform_indices = @transform_0, window_bounds = array<i64: 8, 128>}, {pipeline_mode = #tpu.pipeline_mode<synchronous>, transform_indices = @transform_1, window_bounds = array<i64: 128, 256>}, {pipeline_mode = #tpu.pipeline_mode<synchronous>, transform_indices = @transform_2, window_bounds = array<i64: 1, 256>}, {pipeline_mode = #tpu.pipeline_mode<synchronous>, transform_indices = @transform_3, window_bounds = array<i64: 256, 128>}, {pipeline_mode = #tpu.pipeline_mode<synchronous>, transform_indices = @transform_4, window_bounds = array<i64: 1, 128>}, {pipeline_mode = #tpu.pipeline_mode<synchronous>, transform_indices = @transform_5, window_bounds = array<i64: 128, 64>}, {pipeline_mode = #tpu.pipeline_mode<synchronous>, transform_indices = @transform_6, window_bounds = array<i64: 1, 64>}, {pipeline_mode = #tpu.pipeline_mode<synchronous>, transform_indices = @transform_7, window_bounds = array<i64: 64, 32>}, {pipeline_mode = #tpu.pipeline_mode<synchronous>, transform_indices = @transform_8, window_bounds = array<i64: 1, 32>}, {pipeline_mode = #tpu.pipeline_mode<synchronous>, transform_indices = @transform_9, window_bounds = array<i64: 1, 32>}, {pipeline_mode = #tpu.pipeline_mode<synchronous>, transform_indices = @transform_10, window_bounds = array<i64: 1, 1>}, {transform_indices = @transform_11, window_bounds = array<i64: 8, 1>}]} {
    %c0 = arith.constant 0 : index
    %c0_0 = arith.constant 0 : index
    %0 = vector.load %arg1[%c0, %c0_0] : memref<8x128xf32, #tpu.memory_space<vmem>>, vector<8x128xf32>
    %c0_1 = arith.constant 0 : index
    %c0_2 = arith.constant 0 : index
    %1 = vector.load %arg2[%c0_1, %c0_2] : memref<128x256xf32, #tpu.memory_space<vmem>>, vector<128x256xf32>
    %cst = arith.constant dense<0.000000e+00> : vector<8x256xf32>
    %2 = tpu.matmul %0, %1, %cst {dimension_numbers = #tpu.dot_dimension_numbers<[1], [0], [0], [1], [0, 0, 1, 1], [], []>} : vector<8x128xf32>, vector<128x256xf32>, vector<8x256xf32> -> vector<8x256xf32>
    %c0_3 = arith.constant 0 : index
    %c0_4 = arith.constant 0 : index
    %3 = vector.load %arg3[%c0_3, %c0_4] : memref<1x256xf32, #tpu.memory_space<vmem>>, vector<1x256xf32>
    %4 = vector.broadcast %3 : vector<1x256xf32> to vector<8x256xf32>
    %5 = arith.addf %2, %4 : vector<8x256xf32>
    %cst_5 = arith.constant 0.000000e+00 : f32
    %6 = vector.broadcast %cst_5 : f32 to vector<8x256xf32>
    %7 = arith.maximumf %5, %6 : vector<8x256xf32>
    %c0_6 = arith.constant 0 : index
    %c0_7 = arith.constant 0 : index
    %8 = vector.load %arg4[%c0_6, %c0_7] : memref<256x128xf32, #tpu.memory_space<vmem>>, vector<256x128xf32>
    %cst_8 = arith.constant dense<0.000000e+00> : vector<8x128xf32>
    %9 = tpu.matmul %7, %8, %cst_8 {dimension_numbers = #tpu.dot_dimension_numbers<[1], [0], [0], [1], [0, 0, 1, 1], [], []>} : vector<8x256xf32>, vector<256x128xf32>, vector<8x128xf32> -> vector<8x128xf32>
    %c0_9 = arith.constant 0 : index
    %c0_10 = arith.constant 0 : index
    %10 = vector.load %arg5[%c0_9, %c0_10] : memref<1x128xf32, #tpu.memory_space<vmem>>, vector<1x128xf32>
    %11 = vector.broadcast %10 : vector<1x128xf32> to vector<8x128xf32>
    %12 = arith.addf %9, %11 : vector<8x128xf32>
    %cst_11 = arith.constant 0.000000e+00 : f32
    %13 = vector.broadcast %cst_11 : f32 to vector<8x128xf32>
    %14 = arith.maximumf %12, %13 : vector<8x128xf32>
    %c0_12 = arith.constant 0 : index
    %c0_13 = arith.constant 0 : index
    %15 = vector.load %arg6[%c0_12, %c0_13] : memref<128x64xf32, #tpu.memory_space<vmem>>, vector<128x64xf32>
    %cst_14 = arith.constant dense<0.000000e+00> : vector<8x64xf32>
    %16 = tpu.matmul %14, %15, %cst_14 {dimension_numbers = #tpu.dot_dimension_numbers<[1], [0], [0], [1], [0, 0, 1, 1], [], []>} : vector<8x128xf32>, vector<128x64xf32>, vector<8x64xf32> -> vector<8x64xf32>
    %c0_15 = arith.constant 0 : index
    %c0_16 = arith.constant 0 : index
    %17 = vector.load %arg7[%c0_15, %c0_16] : memref<1x64xf32, #tpu.memory_space<vmem>>, vector<1x64xf32>
    %18 = vector.broadcast %17 : vector<1x64xf32> to vector<8x64xf32>
    %19 = arith.addf %16, %18 : vector<8x64xf32>
    %cst_17 = arith.constant 0.000000e+00 : f32
    %20 = vector.broadcast %cst_17 : f32 to vector<8x64xf32>
    %21 = arith.maximumf %19, %20 : vector<8x64xf32>
    %c0_18 = arith.constant 0 : index
    %c0_19 = arith.constant 0 : index
    %22 = vector.load %arg8[%c0_18, %c0_19] : memref<64x32xf32, #tpu.memory_space<vmem>>, vector<64x32xf32>
    %cst_20 = arith.constant dense<0.000000e+00> : vector<8x32xf32>
    %23 = tpu.matmul %21, %22, %cst_20 {dimension_numbers = #tpu.dot_dimension_numbers<[1], [0], [0], [1], [0, 0, 1, 1], [], []>} : vector<8x64xf32>, vector<64x32xf32>, vector<8x32xf32> -> vector<8x32xf32>
    %c0_21 = arith.constant 0 : index
    %c0_22 = arith.constant 0 : index
    %24 = vector.load %arg9[%c0_21, %c0_22] : memref<1x32xf32, #tpu.memory_space<vmem>>, vector<1x32xf32>
    %25 = vector.broadcast %24 : vector<1x32xf32> to vector<8x32xf32>
    %26 = arith.addf %23, %25 : vector<8x32xf32>
    %cst_23 = arith.constant 0.000000e+00 : f32
    %27 = vector.broadcast %cst_23 : f32 to vector<8x32xf32>
    %28 = arith.maximumf %26, %27 : vector<8x32xf32>
    %c0_24 = arith.constant 0 : index
    %c0_25 = arith.constant 0 : index
    %29 = vector.load %arg10[%c0_24, %c0_25] : memref<1x32xf32, #tpu.memory_space<vmem>>, vector<1x32xf32>
    %30 = vector.broadcast %29 : vector<1x32xf32> to vector<8x32xf32>
    %31 = arith.mulf %28, %30 : vector<8x32xf32>
    %cst_26 = arith.constant dense<0.000000e+00> : vector<8xf32>
    %32 = vector.multi_reduction <add>, %31, %cst_26 [1] : vector<8x32xf32> to vector<8xf32>
    %33 = vector.shape_cast %32 : vector<8xf32> to vector<8x1xf32>
    %c0_27 = arith.constant 0 : index
    %c0_28 = arith.constant 0 : index
    %34 = vector.load %arg11[%c0_27, %c0_28] : memref<1x1xf32, #tpu.memory_space<vmem>>, vector<1x1xf32>
    %35 = vector.broadcast %34 : vector<1x1xf32> to vector<8x1xf32>
    %36 = arith.addf %33, %35 : vector<8x1xf32>
    %cst_29 = arith.constant -3.000000e+01 : f32
    %cst_30 = arith.constant 3.000000e+01 : f32
    %37 = vector.broadcast %cst_29 : f32 to vector<8x1xf32>
    %38 = arith.maximumf %37, %36 : vector<8x1xf32>
    %39 = vector.broadcast %cst_30 : f32 to vector<8x1xf32>
    %40 = arith.minimumf %39, %38 : vector<8x1xf32>
    %cst_31 = arith.constant 0.000000e+00 : f32
    %41 = vector.broadcast %cst_31 : f32 to vector<8x1xf32>
    %42 = arith.subf %41, %40 : vector<8x1xf32>
    %43 = math.exp %42 : vector<8x1xf32>
    %cst_32 = arith.constant 1.000000e+00 : f32
    %44 = vector.broadcast %cst_32 : f32 to vector<8x1xf32>
    %45 = arith.addf %44, %43 : vector<8x1xf32>
    %cst_33 = arith.constant 1.000000e+00 : f32
    %46 = vector.broadcast %cst_33 : f32 to vector<8x1xf32>
    %47 = arith.divf %46, %45 : vector<8x1xf32>
    %c0_34 = arith.constant 0 : index
    %c0_35 = arith.constant 0 : index
    %48 = vector.load %arg12[%c0_34, %c0_35] : memref<8x1xf32, #tpu.memory_space<vmem>>, vector<8x1xf32>
    tpu.vector_store %arg12[%c0_34, %c0_35], %47 {strides = array<i32>} : memref<8x1xf32, #tpu.memory_space<vmem>>, vector<8x1xf32>,
    return
  }
  func.func @transform_0(%arg0: i32) -> (i32, i32) {
    %c0_i32 = arith.constant 0 : i32
    %c0_i32_0 = arith.constant 0 : i32
    return %arg0, %c0_i32 : i32, i32
  }
  func.func @transform_1(%arg0: i32) -> (i32, i32) {
    %c0_i32 = arith.constant 0 : i32
    %c0_i32_0 = arith.constant 0 : i32
    %c0_i32_1 = arith.constant 0 : i32
    return %c0_i32, %c0_i32_0 : i32, i32
  }
  func.func @transform_2(%arg0: i32) -> (i32, i32) {
    %c0_i32 = arith.constant 0 : i32
    %c0_i32_0 = arith.constant 0 : i32
    %c0_i32_1 = arith.constant 0 : i32
    return %c0_i32, %c0_i32_0 : i32, i32
  }
  func.func @transform_3(%arg0: i32) -> (i32, i32) {
    %c0_i32 = arith.constant 0 : i32
    %c0_i32_0 = arith.constant 0 : i32
    %c0_i32_1 = arith.constant 0 : i32
    return %c0_i32, %c0_i32_0 : i32, i32
  }
  func.func @transform_4(%arg0: i32) -> (i32, i32) {
    %c0_i32 = arith.constant 0 : i32
    %c0_i32_0 = arith.constant 0 : i32
    %c0_i32_1 = arith.constant 0 : i32
    return %c0_i32, %c0_i32_0 : i32, i32
  }
  func.func @transform_5(%arg0: i32) -> (i32, i32) {
    %c0_i32 = arith.constant 0 : i32
    %c0_i32_0 = arith.constant 0 : i32
    %c0_i32_1 = arith.constant 0 : i32
    return %c0_i32, %c0_i32_0 : i32, i32
  }
  func.func @transform_6(%arg0: i32) -> (i32, i32) {
    %c0_i32 = arith.constant 0 : i32
    %c0_i32_0 = arith.constant 0 : i32
    %c0_i32_1 = arith.constant 0 : i32
    return %c0_i32, %c0_i32_0 : i32, i32
  }
  func.func @transform_7(%arg0: i32) -> (i32, i32) {
    %c0_i32 = arith.constant 0 : i32
    %c0_i32_0 = arith.constant 0 : i32
    %c0_i32_1 = arith.constant 0 : i32
    return %c0_i32, %c0_i32_0 : i32, i32
  }
  func.func @transform_8(%arg0: i32) -> (i32, i32) {
    %c0_i32 = arith.constant 0 : i32
    %c0_i32_0 = arith.constant 0 : i32
    %c0_i32_1 = arith.constant 0 : i32
    return %c0_i32, %c0_i32_0 : i32, i32
  }
  func.func @transform_9(%arg0: i32) -> (i32, i32) {
    %c0_i32 = arith.constant 0 : i32
    %c0_i32_0 = arith.constant 0 : i32
    %c0_i32_1 = arith.constant 0 : i32
    return %c0_i32, %c0_i32_0 : i32, i32
  }
  func.func @transform_10(%arg0: i32) -> (i32, i32) {
    %c0_i32 = arith.constant 0 : i32
    %c0_i32_0 = arith.constant 0 : i32
    %c0_i32_1 = arith.constant 0 : i32
    return %c0_i32, %c0_i32_0 : i32, i32
  }
  func.func @transform_11(%arg0: i32) -> (i32, i32) {
    %c0_i32 = arith.constant 0 : i32
    %c0_i32_0 = arith.constant 0 : i32
    return %arg0, %c0_i32 : i32, i32
  }
}

</mosaic_0001>

<llo_original>
// kernel: tpu_custom_call.1
$region0: #{tpu_custom_call.1}
  #allocation0 [shape = 'u32[]', space=smem, size = 0x4, offset = 0x4, fixed_abs, tag = 'smem constant byte address 0x4 - core index']
  #allocation1 [shape = 'u32[144,128]{1,0:T(1,128)}', space=vmem, size = 0x12000, scoped, tag = 'internal scratch']
  #allocation2 [shape = 'f32[1,1]{1,0:T(1,128)S(1)}', space=vmem, size = 0x200, scoped, tag = 'scoped memory for tpu_custom_call.1']
  %s0 = inlined_call_operand.vmem [shape: f32[8,128], index: 0, kind: input, shape index: {}]
  %s1 = inlined_call_operand.vmem [shape: f32[128,256], index: 1, kind: input, shape index: {}]
  %s2 = inlined_call_operand.vmem [shape: f32[1,256], index: 2, kind: input, shape index: {}]
  %s3 = inlined_call_operand.hbm [shape: f32[256,128], index: 3, kind: input, shape index: {}]
  %s4 = inlined_call_operand.vmem [shape: f32[1,128], index: 4, kind: input, shape index: {}]
  %s5 = inlined_call_operand.vmem [shape: f32[128,64], index: 5, kind: input, shape index: {}]
  %s6 = inlined_call_operand.vmem [shape: f32[1,64], index: 6, kind: input, shape index: {}]
  %s7 = inlined_call_operand.vmem [shape: f32[64,32], index: 7, kind: input, shape index: {}]
  %s8 = inlined_call_operand.vmem [shape: f32[1,32], index: 8, kind: input, shape index: {}]
  %s9 = inlined_call_operand.vmem [shape: f32[1,32], index: 9, kind: input, shape index: {}]
  %s10 = inlined_call_operand.<no memory space> [shape: f32[1,1], index: 10, kind: input, shape index: {}]
  %s11 = inlined_call_operand.vmem [shape: f32[8,1], index: 11, kind: output, shape index: {}]
  %s12 = sld [smem:[#allocation0]]
  $region58: #{tpu_custom_call.1} parent=0
    _
  %s14 = ssub.s32 1, %s12
  %s15 = scalar_select 0, %s14, %s12
  %v16 = vstv %s10
  %17 = vst [vmem:[#allocation2] sm:$0x1] %v16
  $region1: #{tpu_custom_call.1} parent=0
    #allocation3 [shape = 'u8[131072]{0}', space=vmem, size = 0x20000, scoped, tag = 'input window, operand 3, single buffered']
    #allocation4 [shape = 's32[1]{0}', space=sflag, size = 0x4, scoped, tag = 'scoped memory for tpu_custom_call.1']
    %18 = vsyncpa [#allocation4], 0
    // Predicated region
    $region2: #{tpu_custom_call.1} parent=1 // pred_check
      _
    $region3: #{tpu_custom_call.1} parent=1 // pred_check_branch
      %20 = sbr.rel (0) target = $region5
    $region4: #{tpu_custom_call.1} parent=1 // pred_region
      _
    $region5: #{tpu_custom_call.1} parent=1 // pred_fallthru
      _
    // Predicated region
    $region6: #{tpu_custom_call.1} parent=1 // pred_check
      _
    $region7: #{tpu_custom_call.1} parent=1 // pred_check_branch
      %22 = sbr.rel (0) target = $region9
    $region8: #{tpu_custom_call.1} parent=1 // pred_region
      _
    $region9: #{tpu_custom_call.1} parent=1 // pred_fallthru
      _
    // Predicated region
    $region10: #{tpu_custom_call.1} parent=1 // pred_check
      _
    $region11: #{tpu_custom_call.1} parent=1 // pred_check_branch
      %24 = sbr.rel (0) target = $region13
    $region12: #{tpu_custom_call.1} parent=1 // pred_region
      _
    $region13: #{tpu_custom_call.1} parent=1 // pred_fallthru
      _
    // Predicated region
    $region14: #{tpu_custom_call.1} parent=1 // pred_check
      _
    $region15: #{tpu_custom_call.1} parent=1 // pred_check_branch
      %26 = sbr.rel (0) target = $region17
    $region16: #{tpu_custom_call.1} parent=1 // pred_region
      %s28 = ssub.s32 4096, 4096
      %29 = vsyncadd [#allocation4], %s28
      %s30 = sshll.u32 [#allocation3], 4
      %s31 = int_to_ptr.vmem [resolvable:$true] %s30
      %36 = dma.hbm_to_vmem [thread:$0]  %s3, 4096, %s31, [#allocation4], 128, 128, 8
    $region17: #{tpu_custom_call.1} parent=1 // pred_fallthru
      _
    // Predicated region
    $region18: #{tpu_custom_call.1} parent=1 // pred_check
      _
    $region19: #{tpu_custom_call.1} parent=1 // pred_check_branch
      %38 = sbr.rel (0) target = $region21
    $region20: #{tpu_custom_call.1} parent=1 // pred_region
      _
    $region21: #{tpu_custom_call.1} parent=1 // pred_fallthru
      _
    // Predicated region
    $region22: #{tpu_custom_call.1} parent=1 // pred_check
      _
    $region23: #{tpu_custom_call.1} parent=1 // pred_check_branch
      %40 = sbr.rel (0) target = $region25
    $region24: #{tpu_custom_call.1} parent=1 // pred_region
      _
    $region25: #{tpu_custom_call.1} parent=1 // pred_fallthru
      _
    // Predicated region
    $region26: #{tpu_custom_call.1} parent=1 // pred_check
      _
    $region27: #{tpu_custom_call.1} parent=1 // pred_check_branch
      %42 = sbr.rel (0) target = $region29
    $region28: #{tpu_custom_call.1} parent=1 // pred_region
      _
    $region29: #{tpu_custom_call.1} parent=1 // pred_fallthru
      _
    // Predicated region
    $region30: #{tpu_custom_call.1} parent=1 // pred_check
      _
    $region31: #{tpu_custom_call.1} parent=1 // pred_check_branch
      %44 = sbr.rel (0) target = $region33
    $region32: #{tpu_custom_call.1} parent=1 // pred_region
      _
    $region33: #{tpu_custom_call.1} parent=1 // pred_fallthru
      _
    // Predicated region
    $region34: #{tpu_custom_call.1} parent=1 // pred_check
      _
    $region35: #{tpu_custom_call.1} parent=1 // pred_check_branch
      %46 = sbr.rel (0) target = $region37
    $region36: #{tpu_custom_call.1} parent=1 // pred_region
      _
    $region37: #{tpu_custom_call.1} parent=1 // pred_fallthru
      _
    // Predicated region
    $region38: #{tpu_custom_call.1} parent=1 // pred_check
      _
    $region39: #{tpu_custom_call.1} parent=1 // pred_check_branch
      %48 = sbr.rel (0) target = $region41
    $region40: #{tpu_custom_call.1} parent=1 // pred_region
      _
    $region41: #{tpu_custom_call.1} parent=1 // pred_fallthru
      _
    // Predicated region
    $region42: #{tpu_custom_call.1} parent=1 // pred_check
      _
    $region43: #{tpu_custom_call.1} parent=1 // pred_check_branch
      %50 = sbr.rel (0) target = $region45
    $region44: #{tpu_custom_call.1} parent=1 // pred_region
      _
    $region45: #{tpu_custom_call.1} parent=1 // pred_fallthru
      _
    // Predicated region
    $region46: #{tpu_custom_call.1} parent=1 // pred_check
      _
    $region47: #{tpu_custom_call.1} parent=1 // pred_check_branch
      %52 = sbr.rel (0) target = $region49
    $region48: #{tpu_custom_call.1} parent=1 // pred_region
      %53 = dma.done [#allocation4], 4096
    $region49: #{tpu_custom_call.1} parent=1 // pred_fallthru
      _
    %v54 = vld [vmem:[%s0] sm:$0xff]
    %v55 = vld [vmem:[%s1] sm:$0xff]
    %v56 = vld [vmem:[%s1 + $0x8] sm:$0xff]
    %v57 = vld [vmem:[%s1 + $0x10] sm:$0xff]
    %v58 = vld [vmem:[%s1 + $0x18] sm:$0xff]
    %v59 = vld [vmem:[%s1 + $0x20] sm:$0xff]
    %v60 = vld [vmem:[%s1 + $0x28] sm:$0xff]
    %v61 = vld [vmem:[%s1 + $0x30] sm:$0xff]
    %v62 = vld [vmem:[%s1 + $0x38] sm:$0xff]
    %v63 = vld [vmem:[%s1 + $0x40] sm:$0xff]
    %v64 = vld [vmem:[%s1 + $0x48] sm:$0xff]
    %v65 = vld [vmem:[%s1 + $0x50] sm:$0xff]
    %v66 = vld [vmem:[%s1 + $0x58] sm:$0xff]
    %v67 = vld [vmem:[%s1 + $0x60] sm:$0xff]
    %v68 = vld [vmem:[%s1 + $0x68] sm:$0xff]
    %v69 = vld [vmem:[%s1 + $0x70] sm:$0xff]
    %v70 = vld [vmem:[%s1 + $0x78] sm:$0xff]
    %v71 = vld [vmem:[%s1 + $0x80] sm:$0xff]
    %v72 = vld [vmem:[%s1 + $0x88] sm:$0xff]
    %v73 = vld [vmem:[%s1 + $0x90] sm:$0xff]
    %v74 = vld [vmem:[%s1 + $0x98] sm:$0xff]
    %v75 = vld [vmem:[%s1 + $0xa0] sm:$0xff]
    %v76 = vld [vmem:[%s1 + $0xa8] sm:$0xff]
    %v77 = vld [vmem:[%s1 + $0xb0] sm:$0xff]
    %v78 = vld [vmem:[%s1 + $0xb8] sm:$0xff]
    %v79 = vld [vmem:[%s1 + $0xc0] sm:$0xff]
    %v80 = vld [vmem:[%s1 + $0xc8] sm:$0xff]
    %v81 = vld [vmem:[%s1 + $0xd0] sm:$0xff]
    %v82 = vld [vmem:[%s1 + $0xd8] sm:$0xff]
    %v83 = vld [vmem:[%s1 + $0xe0] sm:$0xff]
    %v84 = vld [vmem:[%s1 + $0xe8] sm:$0xff]
    %v85 = vld [vmem:[%s1 + $0xf0] sm:$0xff]
    %v86 = vld [vmem:[%s1 + $0xf8] sm:$0xff]
    %v87 = vld [vmem:[%s2] sm:$0x3]
    %v89 = vlaneseq
    %v90 = vshrl.u32 %v89, 7
    %v91 = vsub.s32 0, %v90
    %v92 = vrot.slane %v87, %v91
    %v93 = vlaneseq
    %v94 = vshrl.u32 %v93, 7
    %v95 = vsub.s32 1, %v94
    %v96 = vrot.slane %v87, %v95
    %99 = vmatprep.subr.mxu0 %v56
    %100 = vmatpush1.msra.mxu0 %v55
    %101 = vmatprep.subr.mxu0 %v58
    %102 = vmatpush1.msra.mxu0 %v57
    %103 = vmatprep.subr.mxu0 %v60
    %104 = vmatpush1.msra.mxu0 %v59
    %105 = vmatprep.subr.mxu0 %v62
    %106 = vmatpush1.msra.mxu0 %v61
    %107 = vmatprep.subr.mxu0 %v64
    %108 = vmatpush1.msra.mxu0 %v63
    %109 = vmatprep.subr.mxu0 %v66
    %110 = vmatpush1.msra.mxu0 %v65
    %111 = vmatprep.subr.mxu0 %v68
    %112 = vmatpush1.msra.mxu0 %v67
    %113 = vmatprep.subr.mxu0 %v70
    %114 = vmatpush1.msra.mxu0 %v69
    %115 = vmatprep.subr.mxu0 %v72
    %116 = vmatpush1.msra.mxu0 %v71
    %117 = vmatprep.subr.mxu0 %v74
    %118 = vmatpush1.msra.mxu0 %v73
    %119 = vmatprep.subr.mxu0 %v76
    %120 = vmatpush1.msra.mxu0 %v75
    %121 = vmatprep.subr.mxu0 %v78
    %122 = vmatpush1.msra.mxu0 %v77
    %123 = vmatprep.subr.mxu0 %v80
    %124 = vmatpush1.msra.mxu0 %v79
    %125 = vmatprep.subr.mxu0 %v82
    %126 = vmatpush1.msra.mxu0 %v81
    %127 = vmatprep.subr.mxu0 %v84
    %128 = vmatpush1.msra.mxu0 %v83
    %129 = vmatprep.subr.mxu0 %v86
    %130 = vmatpush1.msra.mxu0 %v85
    %131 = vmatprep.subr.mxu0 0.0
    %132 = vmatpush1.msra.mxu0 0.0
    %133 = vmatprep.subr.mxu0 0.0
    %134 = vmatpush1.msra.mxu0 0.0
    %135 = vmatprep.subr.mxu0 0.0
    %136 = vmatpush1.msra.mxu0 0.0
    %137 = vmatprep.subr.mxu0 0.0
    %138 = vmatpush1.msra.mxu0 0.0
    %139 = vmatprep.subr.mxu0 0.0
    %140 = vmatpush1.msra.mxu0 0.0
    %141 = vmatprep.subr.mxu0 0.0
    %142 = vmatpush1.msra.mxu0 0.0
    %143 = vmatprep.subr.mxu0 0.0
    %144 = vmatpush1.msra.mxu0 0.0
    %145 = vmatprep.subr.mxu0 0.0
    %146 = vmatpush1.msra.mxu0 0.0
    %147 = vmatprep.subr.mxu0 0.0
    %148 = vmatpush1.msra.mxu0 0.0
    %149 = vmatprep.subr.mxu0 0.0
    %150 = vmatpush1.msra.mxu0 0.0
    %151 = vmatprep.subr.mxu0 0.0
    %152 = vmatpush1.msra.mxu0 0.0
    %153 = vmatprep.subr.mxu0 0.0
    %154 = vmatpush1.msra.mxu0 0.0
    %155 = vmatprep.subr.mxu0 0.0
    %156 = vmatpush1.msra.mxu0 0.0
    %157 = vmatprep.subr.mxu0 0.0
    %158 = vmatpush1.msra.mxu0 0.0
    %159 = vmatprep.subr.mxu0 0.0
    %160 = vmatpush1.msra.mxu0 0.0
    %161 = vmatprep.subr.mxu0 0.0
    %162 = vmatpush1.msra.mxu0 0.0
    %163 = vmatprep.mubr.f32.mxu0 0.0
    %164 = vmatmul.mubr.f32.gmra.mrb[0].mxu0 %v54
    %v165 = vpop.f32.mrb[0].mxu0
    %v166 = vadd.f32 %v92, %v165
    %v167 = vpop.f32.mrb[0].mxu0
    %v168 = vadd.f32 %v96, %v167
    %169 = vdwg.mxu0
    %v170 = vmax.f32 %v166, 0.0
    %v171 = vmax.f32 %v168, 0.0
    %v172 = vld [vmem:[#allocation3] sm:$0xff]
    %v173 = vld [vmem:[#allocation3 + $0x8] sm:$0xff]
    %v174 = vld [vmem:[#allocation3 + $0x10] sm:$0xff]
    %v175 = vld [vmem:[#allocation3 + $0x18] sm:$0xff]
    %v176 = vld [vmem:[#allocation3 + $0x20] sm:$0xff]
    %v177 = vld [vmem:[#allocation3 + $0x28] sm:$0xff]
    %v178 = vld [vmem:[#allocation3 + $0x30] sm:$0xff]
    %v179 = vld [vmem:[#allocation3 + $0x38] sm:$0xff]
    %v180 = vld [vmem:[#allocation3 + $0x40] sm:$0xff]
    %v181 = vld [vmem:[#allocation3 + $0x48] sm:$0xff]
    %v182 = vld [vmem:[#allocation3 + $0x50] sm:$0xff]
    %v183 = vld [vmem:[#allocation3 + $0x58] sm:$0xff]
    %v184 = vld [vmem:[#allocation3 + $0x60] sm:$0xff]
    %v185 = vld [vmem:[#allocation3 + $0x68] sm:$0xff]
    %v186 = vld [vmem:[#allocation3 + $0x70] sm:$0xff]
    %v187 = vld [vmem:[#allocation3 + $0x78] sm:$0xff]
    %v188 = vld [vmem:[#allocation3 + $0x80] sm:$0xff]
    %v189 = vld [vmem:[#allocation3 + $0x88] sm:$0xff]
    %v190 = vld [vmem:[#allocation3 + $0x90] sm:$0xff]
    %v191 = vld [vmem:[#allocation3 + $0x98] sm:$0xff]
    %v192 = vld [vmem:[#allocation3 + $0xa0] sm:$0xff]
    %v193 = vld [vmem:[#allocation3 + $0xa8] sm:$0xff]
    %v194 = vld [vmem:[#allocation3 + $0xb0] sm:$0xff]
    %v195 = vld [vmem:[#allocation3 + $0xb8] sm:$0xff]
    %v196 = vld [vmem:[#allocation3 + $0xc0] sm:$0xff]
    %v197 = vld [vmem:[#allocation3 + $0xc8] sm:$0xff]
    %v198 = vld [vmem:[#allocation3 + $0xd0] sm:$0xff]
    %v199 = vld [vmem:[#allocation3 + $0xd8] sm:$0xff]
    %v200 = vld [vmem:[#allocation3 + $0xe0] sm:$0xff]
    %v201 = vld [vmem:[#allocation3 + $0xe8] sm:$0xff]
    %v202 = vld [vmem:[#allocation3 + $0xf0] sm:$0xff]
    %v203 = vld [vmem:[#allocation3 + $0xf8] sm:$0xff]
    %v204 = vld [vmem:[%s4] sm:$0x1]
    %v206 = vlaneseq
    %v207 = vshrl.u32 %v206, 7
    %v208 = vsub.s32 0, %v207
    %v209 = vrot.slane %v204, %v208
    %211 = vmatprep.subr.mxu0 0.0
    %212 = vmatpush1.msra.mxu0 %v172
    %213 = vmatprep.subr.mxu0 0.0
    %214 = vmatpush1.msra.mxu0 %v173
    %215 = vmatprep.subr.mxu0 0.0
    %216 = vmatpush1.msra.mxu0 %v174
    %217 = vmatprep.subr.mxu0 0.0
    %218 = vmatpush1.msra.mxu0 %v175
    %219 = vmatprep.subr.mxu0 0.0
    %220 = vmatpush1.msra.mxu0 %v176
    %221 = vmatprep.subr.mxu0 0.0
    %222 = vmatpush1.msra.mxu0 %v177
    %223 = vmatprep.subr.mxu0 0.0
    %224 = vmatpush1.msra.mxu0 %v178
    %225 = vmatprep.subr.mxu0 0.0
    %226 = vmatpush1.msra.mxu0 %v179
    %227 = vmatprep.subr.mxu0 0.0
    %228 = vmatpush1.msra.mxu0 %v180
    %229 = vmatprep.subr.mxu0 0.0
    %230 = vmatpush1.msra.mxu0 %v181
    %231 = vmatprep.subr.mxu0 0.0
    %232 = vmatpush1.msra.mxu0 %v182
    %233 = vmatprep.subr.mxu0 0.0
    %234 = vmatpush1.msra.mxu0 %v183
    %235 = vmatprep.subr.mxu0 0.0
    %236 = vmatpush1.msra.mxu0 %v184
    %237 = vmatprep.subr.mxu0 0.0
    %238 = vmatpush1.msra.mxu0 %v185
    %239 = vmatprep.subr.mxu0 0.0
    %240 = vmatpush1.msra.mxu0 %v186
    %241 = vmatprep.subr.mxu0 0.0
    %242 = vmatpush1.msra.mxu0 %v187
    %243 = vmatprep.subr.mxu0 0.0
    %244 = vmatpush1.msra.mxu0 %v188
    %245 = vmatprep.subr.mxu0 0.0
    %246 = vmatpush1.msra.mxu0 %v189
    %247 = vmatprep.subr.mxu0 0.0
    %248 = vmatpush1.msra.mxu0 %v190
    %249 = vmatprep.subr.mxu0 0.0
    %250 = vmatpush1.msra.mxu0 %v191
    %251 = vmatprep.subr.mxu0 0.0
    %252 = vmatpush1.msra.mxu0 %v192
    %253 = vmatprep.subr.mxu0 0.0
    %254 = vmatpush1.msra.mxu0 %v193
    %255 = vmatprep.subr.mxu0 0.0
    %256 = vmatpush1.msra.mxu0 %v194
    %257 = vmatprep.subr.mxu0 0.0
    %258 = vmatpush1.msra.mxu0 %v195
    %259 = vmatprep.subr.mxu0 0.0
    %260 = vmatpush1.msra.mxu0 %v196
    %261 = vmatprep.subr.mxu0 0.0
    %262 = vmatpush1.msra.mxu0 %v197
    %263 = vmatprep.subr.mxu0 0.0
    %264 = vmatpush1.msra.mxu0 %v198
    %265 = vmatprep.subr.mxu0 0.0
    %266 = vmatpush1.msra.mxu0 %v199
    %267 = vmatprep.subr.mxu0 0.0
    %268 = vmatpush1.msra.mxu0 %v200
    %269 = vmatprep.subr.mxu0 0.0
    %270 = vmatpush1.msra.mxu0 %v201
    %271 = vmatprep.subr.mxu0 0.0
    %272 = vmatpush1.msra.mxu0 %v202
    %273 = vmatprep.subr.mxu0 0.0
    %274 = vmatpush1.msra.mxu0 %v203
    %275 = vmatprep.mubr.f32.mxu0 %v171
    %276 = vmatmul.mubr.f32.gmra.mrb[0].mxu0 %v170
    %v277 = vpop.f32.mrb[0].mxu0
    %v278 = vadd.f32 %v209, %v277
    %v279 = vpop.f32.mrb[0].mxu0
    %280 = vdwg.mxu0
    %v281 = vmax.f32 %v278, 0.0
    %v282 = vld [vmem:[%s5] sm:$0xff]
    %v283 = vld [vmem:[%s5 + $0x8] sm:$0xff]
    %v284 = vld [vmem:[%s5 + $0x10] sm:$0xff]
    %v285 = vld [vmem:[%s5 + $0x18] sm:$0xff]
    %v286 = vld [vmem:[%s5 + $0x20] sm:$0xff]
    %v287 = vld [vmem:[%s5 + $0x28] sm:$0xff]
    %v288 = vld [vmem:[%s5 + $0x30] sm:$0xff]
    %v289 = vld [vmem:[%s5 + $0x38] sm:$0xff]
    %v290 = vld [vmem:[%s5 + $0x40] sm:$0xff]
    %v291 = vld [vmem:[%s5 + $0x48] sm:$0xff]
    %v292 = vld [vmem:[%s5 + $0x50] sm:$0xff]
    %v293 = vld [vmem:[%s5 + $0x58] sm:$0xff]
    %v294 = vld [vmem:[%s5 + $0x60] sm:$0xff]
    %v295 = vld [vmem:[%s5 + $0x68] sm:$0xff]
    %v296 = vld [vmem:[%s5 + $0x70] sm:$0xff]
    %v297 = vld [vmem:[%s5 + $0x78] sm:$0xff]
    %v298 = vld [vmem:[%s6] sm:$0x1]
    %v300 = vlaneseq
    %v301 = vshrl.u32 %v300, 7
    %v302 = vsub.s32 0, %v301
    %v303 = vrot.slane %v298, %v302
    %305 = vmatprep.subr.mxu0 0.0
    %306 = vmatpush1.msra.mxu0 %v282
    %307 = vmatprep.subr.mxu0 0.0
    %308 = vmatpush1.msra.mxu0 %v283
    %309 = vmatprep.subr.mxu0 0.0
    %310 = vmatpush1.msra.mxu0 %v284
    %311 = vmatprep.subr.mxu0 0.0
    %312 = vmatpush1.msra.mxu0 %v285
    %313 = vmatprep.subr.mxu0 0.0
    %314 = vmatpush1.msra.mxu0 %v286
    %315 = vmatprep.subr.mxu0 0.0
    %316 = vmatpush1.msra.mxu0 %v287
    %317 = vmatprep.subr.mxu0 0.0
    %318 = vmatpush1.msra.mxu0 %v288
    %319 = vmatprep.subr.mxu0 0.0
    %320 = vmatpush1.msra.mxu0 %v289
    %321 = vmatprep.subr.mxu0 0.0
    %322 = vmatpush1.msra.mxu0 %v290
    %323 = vmatprep.subr.mxu0 0.0
    %324 = vmatpush1.msra.mxu0 %v291
    %325 = vmatprep.subr.mxu0 0.0
    %326 = vmatpush1.msra.mxu0 %v292
    %327 = vmatprep.subr.mxu0 0.0
    %328 = vmatpush1.msra.mxu0 %v293
    %329 = vmatprep.subr.mxu0 0.0
    %330 = vmatpush1.msra.mxu0 %v294
    %331 = vmatprep.subr.mxu0 0.0
    %332 = vmatpush1.msra.mxu0 %v295
    %333 = vmatprep.subr.mxu0 0.0
    %334 = vmatpush1.msra.mxu0 %v296
    %335 = vmatprep.subr.mxu0 0.0
    %336 = vmatpush1.msra.mxu0 %v297
    %337 = vmatprep.subr.mxu0 0.0
    %338 = vmatpush1.msra.mxu0 0.0
    %339 = vmatprep.subr.mxu0 0.0
    %340 = vmatpush1.msra.mxu0 0.0
    %341 = vmatprep.subr.mxu0 0.0
    %342 = vmatpush1.msra.mxu0 0.0
    %343 = vmatprep.subr.mxu0 0.0
    %344 = vmatpush1.msra.mxu0 0.0
    %345 = vmatprep.subr.mxu0 0.0
    %346 = vmatpush1.msra.mxu0 0.0
    %347 = vmatprep.subr.mxu0 0.0
    %348 = vmatpush1.msra.mxu0 0.0
    %349 = vmatprep.subr.mxu0 0.0
    %350 = vmatpush1.msra.mxu0 0.0
    %351 = vmatprep.subr.mxu0 0.0
    %352 = vmatpush1.msra.mxu0 0.0
    %353 = vmatprep.subr.mxu0 0.0
    %354 = vmatpush1.msra.mxu0 0.0
    %355 = vmatprep.subr.mxu0 0.0
    %356 = vmatpush1.msra.mxu0 0.0
    %357 = vmatprep.subr.mxu0 0.0
    %358 = vmatpush1.msra.mxu0 0.0
    %359 = vmatprep.subr.mxu0 0.0
    %360 = vmatpush1.msra.mxu0 0.0
    %361 = vmatprep.subr.mxu0 0.0
    %362 = vmatpush1.msra.mxu0 0.0
    %363 = vmatprep.subr.mxu0 0.0
    %364 = vmatpush1.msra.mxu0 0.0
    %365 = vmatprep.subr.mxu0 0.0
    %366 = vmatpush1.msra.mxu0 0.0
    %367 = vmatprep.subr.mxu0 0.0
    %368 = vmatpush1.msra.mxu0 0.0
    %369 = vmatprep.mubr.f32.mxu0 0.0
    %370 = vmatmul.mubr.f32.gmra.mrb[0].mxu0 %v281
    %v371 = vpop.f32.mrb[0].mxu0
    %v372 = vadd.f32 %v303, %v371
    %v373 = vpop.f32.mrb[0].mxu0
    %374 = vdwg.mxu0
    %v375 = vmax.f32 %v372, 0.0
    %v376 = vld [vmem:[%s7] sm:$0xff]
    %v377 = vld [vmem:[%s7 + $0x8] sm:$0xff]
    %v378 = vld [vmem:[%s7 + $0x10] sm:$0xff]
    %v379 = vld [vmem:[%s7 + $0x18] sm:$0xff]
    %v380 = vld [vmem:[%s7 + $0x20] sm:$0xff]
    %v381 = vld [vmem:[%s7 + $0x28] sm:$0xff]
    %v382 = vld [vmem:[%s7 + $0x30] sm:$0xff]
    %v383 = vld [vmem:[%s7 + $0x38] sm:$0xff]
    %v384 = vld [vmem:[%s8] sm:$0x1]
    %v386 = vlaneseq
    %v387 = vshrl.u32 %v386, 7
    %v388 = vsub.s32 0, %v387
    %v389 = vrot.slane %v384, %v388
    %vm391 = vcmask 523264
    %v393 = vsel %vm391, %v375, 0
    %395 = vmatprep.subr.mxu0 0.0
    %396 = vmatpush1.msra.mxu0 %v376
    %397 = vmatprep.subr.mxu0 0.0
    %398 = vmatpush1.msra.mxu0 %v377
    %399 = vmatprep.subr.mxu0 0.0
    %400 = vmatpush1.msra.mxu0 %v378
    %401 = vmatprep.subr.mxu0 0.0
    %402 = vmatpush1.msra.mxu0 %v379
    %403 = vmatprep.subr.mxu0 0.0
    %404 = vmatpush1.msra.mxu0 %v380
    %405 = vmatprep.subr.mxu0 0.0
    %406 = vmatpush1.msra.mxu0 %v381
    %407 = vmatprep.subr.mxu0 0.0
    %408 = vmatpush1.msra.mxu0 %v382
    %409 = vmatprep.subr.mxu0 0.0
    %410 = vmatpush1.msra.mxu0 %v383
    %411 = vmatprep.subr.mxu0 0.0
    %412 = vmatpush1.msra.mxu0 0.0
    %413 = vmatprep.subr.mxu0 0.0
    %414 = vmatpush1.msra.mxu0 0.0
    %415 = vmatprep.subr.mxu0 0.0
    %416 = vmatpush1.msra.mxu0 0.0
    %417 = vmatprep.subr.mxu0 0.0
    %418 = vmatpush1.msra.mxu0 0.0
    %419 = vmatprep.subr.mxu0 0.0
    %420 = vmatpush1.msra.mxu0 0.0
    %421 = vmatprep.subr.mxu0 0.0
    %422 = vmatpush1.msra.mxu0 0.0
    %423 = vmatprep.subr.mxu0 0.0
    %424 = vmatpush1.msra.mxu0 0.0
    %425 = vmatprep.subr.mxu0 0.0
    %426 = vmatpush1.msra.mxu0 0.0
    %427 = vmatprep.subr.mxu0 0.0
    %428 = vmatpush1.msra.mxu0 0.0
    %429 = vmatprep.subr.mxu0 0.0
    %430 = vmatpush1.msra.mxu0 0.0
    %431 = vmatprep.subr.mxu0 0.0
    %432 = vmatpush1.msra.mxu0 0.0
    %433 = vmatprep.subr.mxu0 0.0
    %434 = vmatpush1.msra.mxu0 0.0
    %435 = vmatprep.subr.mxu0 0.0
    %436 = vmatpush1.msra.mxu0 0.0
    %437 = vmatprep.subr.mxu0 0.0
    %438 = vmatpush1.msra.mxu0 0.0
    %439 = vmatprep.subr.mxu0 0.0
    %440 = vmatpush1.msra.mxu0 0.0
    %441 = vmatprep.subr.mxu0 0.0
    %442 = vmatpush1.msra.mxu0 0.0
    %443 = vmatprep.subr.mxu0 0.0
    %444 = vmatpush1.msra.mxu0 0.0
    %445 = vmatprep.subr.mxu0 0.0
    %446 = vmatpush1.msra.mxu0 0.0
    %447 = vmatprep.subr.mxu0 0.0
    %448 = vmatpush1.msra.mxu0 0.0
    %449 = vmatprep.subr.mxu0 0.0
    %450 = vmatpush1.msra.mxu0 0.0
    %451 = vmatprep.subr.mxu0 0.0
    %452 = vmatpush1.msra.mxu0 0.0
    %453 = vmatprep.subr.mxu0 0.0
    %454 = vmatpush1.msra.mxu0 0.0
    %455 = vmatprep.subr.mxu0 0.0
    %456 = vmatpush1.msra.mxu0 0.0
    %457 = vmatprep.subr.mxu0 0.0
    %458 = vmatpush1.msra.mxu0 0.0
    %459 = vmatprep.mubr.f32.mxu0 0.0
    %460 = vmatmul.mubr.f32.gmra.mrb[0].mxu0 %v393
    %v461 = vpop.f32.mrb[0].mxu0
    %v462 = vadd.f32 %v389, %v461
    %v463 = vpop.f32.mrb[0].mxu0
    %464 = vdwg.mxu0
    %v465 = vmax.f32 %v462, 0.0
    %v466 = vld [vmem:[%s9] sm:$0x1]
    %v468 = vlaneseq
    %v469 = vshrl.u32 %v468, 7
    %v470 = vsub.s32 0, %v469
    %v471 = vrot.slane %v466, %v470
    %v473 = vmul.f32 %v465, %v471
    %vm474 = vcmask 261120
    %v475 = vsel %vm474, %v473, 0.0
    %476 = vadd.xlane.f32.xlu0 %v475
    %v477 = vpop.xlane.xlu0 %476
    %v478 = vld [vmem:[#allocation2] sm:$0x1]
    %v480 = vlaneseq
    %v481 = vshrl.u32 %v480, 7
    %v482 = vsub.s32 0, %v481
    %v483 = vrot.slane %v478, %v482
    %v485 = vadd.f32 %v477, %v483
    %v486 = vmax.f32 %v485, -30.0
    %v487 = vmin.f32 %v486, 30.0
    %v488 = vsub.f32 0.0, %v487
    %v489 = vmul.f32 %v488, 1.442695
    %v490 = vpow.pop %v489
    %v491 = vadd.f32 %v490, 1.0
    %v492 = vrcp.pop %v491
    %v493 = vmul.f32 1.0, %v492
    %vm494 = vcmask 7168
    %495 = vst.msk [vmem:[%s11] sm:$0xff] %vm494, %v493
    // Predicated region
    $region50: #{tpu_custom_call.1} parent=1 // pred_check
      _
    $region51: #{tpu_custom_call.1} parent=1 // pred_check_branch
      %497 = sbr.rel (0) target = $region53
    $region52: #{tpu_custom_call.1} parent=1 // pred_region
      _
    $region53: #{tpu_custom_call.1} parent=1 // pred_fallthru
      _
    // Predicated region
    $region54: #{tpu_custom_call.1} parent=1 // pred_check
      _
    $region55: #{tpu_custom_call.1} parent=1 // pred_check_branch
      %499 = sbr.rel (0) target = $region57
    $region56: #{tpu_custom_call.1} parent=1 // pred_region
      _
    $region57: #{tpu_custom_call.1} parent=1 // pred_fallthru
      _
    %500 = vsyncpa [#allocation4], 1

</llo_original>
